<compile_context>
chip_gen: v5e
topology: v5e:2x2
jax: 0.10.0
libtpu: 0.0.40
codegen_flags: <defaults>
</compile_context>

<pallas_src>
import functools

import jax
import jax.numpy as jnp
from jax.experimental import pallas as pl
from jax.experimental.pallas import tpu as pltpu


# ----------------------------- Pallas kernel ----------------------------------------

def _outconv_kernel(w_ref, b_ref, x_ref, o_ref, *, activation):
    """One (n, l-tile) step:  o = act(W @ x_tile + b), all in VMEM.

    w_ref: (Cout, Cin)      weight (resident, same block every step)
    b_ref: (Cout, 1)        bias
    x_ref: (1, Cin, tl)     input slab, lanes = L
    o_ref: (1, Cout, tl)    output slab, lanes = L
    """
    acc = jnp.dot(w_ref[...], x_ref[0], preferred_element_type=jnp.float32)
    o_ref[0] = activation(acc + b_ref[...]).astype(o_ref.dtype)


# ----------------------------- wrapper ----------------------------------------------

def out_conv_forward(x_ncl, weight, bias, activation=jnp.tanh, *, tl_max=512):
    """OutConv.forward: activation(Conv1d(kernel_size=1)(x)).

    x_ncl:  (N, Cin, L)  float32 (PyTorch NCW layout)
    weight: (Cout, Cin, 1)
    bias:   (Cout,)
    returns (N, Cout, L) float32
    """
    n, cin, l = x_ncl.shape
    cout = weight.shape[0]

    w = weight[:, :, 0].astype(jnp.float32)          # (Cout, Cin)
    b2 = bias.astype(jnp.float32).reshape(cout, 1)   # (Cout, 1), broadcast over lanes

    # L tile: full L when it is small (block == full dim satisfies the (8,128)
    # rule), else a 128-aligned lane-dense tile; boundary tiles are masked by
    # Pallas, so no wrapper-side padding is needed.
    tl = l if l <= tl_max else tl_max
    grid = (n, pl.cdiv(l, tl))

    # TODO(synk): if Cin ever grows past a few thousand channels, add a third
    # ("arbitrary") grid axis over Cin with a VMEM f32 accumulator; for typical
    # OutConv channel counts the whole Cin fits in one block.
    out = pl.pallas_call(
        functools.partial(_outconv_kernel, activation=activation),
        out_shape=jax.ShapeDtypeStruct((n, cout, l), jnp.float32),
        grid_spec=pltpu.PrefetchScalarGridSpec(
            num_scalar_prefetch=0,
            grid=grid,
            in_specs=[
                pl.BlockSpec((cout, cin), lambda b, lt: (0, 0)),     # W
                pl.BlockSpec((cout, 1), lambda b, lt: (0, 0)),       # bias
                pl.BlockSpec((1, cin, tl), lambda b, lt: (b, 0, lt)),  # x slab
            ],
            out_specs=pl.BlockSpec((1, cout, tl), lambda b, lt: (b, 0, lt)),
        ),
        compiler_params=pltpu.CompilerParams(
            dimension_semantics=("parallel", "parallel"),
            vmem_limit_bytes=64 * 1024 * 1024),
    )(w, b2, x_ncl)
    return out


# ----------------------------- demo / self-check ------------------------------------

def _conv1d_init(key, cout, cin, ksize=1):
    # Matches PyTorch Conv1d default init: U(-1/sqrt(fan_in), 1/sqrt(fan_in)).
    fan_in = cin * ksize
    bound = 1.0 / (fan_in ** 0.5)
    kw, kb = jax.random.split(key)
    w = jax.random.uniform(kw, (cout, cin, ksize), jnp.float32, -bound, bound)
    b = jax.random.uniform(kb, (cout,), jnp.float32, -bound, bound)
    return w, b


if __name__ == "__main__":
    key = jax.random.PRNGKey(0)
    kp, kx = jax.random.split(key)

    batch, in_channels, out_channels, length = 2, 4, 3, 16

    weight, bias = _conv1d_init(kp, out_channels, in_channels, 1)
    x = jax.random.normal(kx, (batch, in_channels, length), jnp.float32)

    fwd = jax.jit(lambda inp: out_conv_forward(inp, weight, bias))
    out = jax.block_until_ready(fwd(x))

    # Pure-JAX reference of the PyTorch module.
    ref = jnp.tanh(jnp.einsum("ncl,oc->nol", x, weight[:, :, 0]) + bias[None, :, None])

    assert out.shape == (batch, out_channels, length), out.shape
    assert bool(jnp.all(jnp.isfinite(out)))
    assert bool(jnp.allclose(out, ref, atol=1e-5, rtol=1e-5)), float(
        jnp.max(jnp.abs(out - ref)))
    print("KERNEL_OK")
</pallas_src>

<mosaic_0001>
module attributes {stable_mosaic.version = 11 : i64} {
  func.func @_outconv_kernel(%arg0: i32, %arg1: i32, %arg2: memref<3x4xf32, #tpu.memory_space<vmem>>, %arg3: memref<3x1xf32, #tpu.memory_space<vmem>>, %arg4: memref<1x4x16xf32, #tpu.memory_space<vmem>>, %arg5: memref<1x3x16xf32, #tpu.memory_space<vmem>>) attributes {dimension_semantics = [#tpu.dimension_semantics<parallel>, #tpu.dimension_semantics<parallel>], iteration_bounds = array<i64: 2, 1>, scalar_prefetch = 0 : i64, scratch_operands = 0 : i64, tpu.core_type = #tpu.core_type<tc>, window_params = [{pipeline_mode = #tpu.pipeline_mode<synchronous>, transform_indices = @transform_0, window_bounds = array<i64: 3, 4>}, {pipeline_mode = #tpu.pipeline_mode<synchronous>, transform_indices = @transform_1, window_bounds = array<i64: 3, 1>}, {transform_indices = @transform_2, window_bounds = array<i64: 1, 4, 16>}, {transform_indices = @transform_3, window_bounds = array<i64: 1, 3, 16>}]} {
    %c0 = arith.constant 0 : index
    %c0_0 = arith.constant 0 : index
    %0 = vector.load %arg2[%c0, %c0_0] : memref<3x4xf32, #tpu.memory_space<vmem>>, vector<3x4xf32>
    %c0_1 = arith.constant 0 : index
    %c0_2 = arith.constant 0 : index
    %c0_3 = arith.constant 0 : index
    %1 = vector.load %arg4[%c0_1, %c0_2, %c0_3] : memref<1x4x16xf32, #tpu.memory_space<vmem>>, vector<1x4x16xf32>
    %2 = vector.shape_cast %1 : vector<1x4x16xf32> to vector<4x16xf32>
    %cst = arith.constant dense<0.000000e+00> : vector<3x16xf32>
    %3 = tpu.matmul %0, %2, %cst {dimension_numbers = #tpu.dot_dimension_numbers<[1], [0], [0], [1], [0, 0, 1, 1], [], []>} : vector<3x4xf32>, vector<4x16xf32>, vector<3x16xf32> -> vector<3x16xf32>
    %c0_4 = arith.constant 0 : index
    %c0_5 = arith.constant 0 : index
    %4 = vector.load %arg3[%c0_4, %c0_5] : memref<3x1xf32, #tpu.memory_space<vmem>>, vector<3x1xf32>
    %5 = vector.broadcast %4 : vector<3x1xf32> to vector<3x16xf32>
    %6 = arith.addf %3, %5 : vector<3x16xf32>
    %7 = math.tanh %6 : vector<3x16xf32>
    %c0_6 = arith.constant 0 : index
    %c0_7 = arith.constant 0 : index
    %c0_8 = arith.constant 0 : index
    %8 = vector.load %arg5[%c0_6, %c0_7, %c0_8] : memref<1x3x16xf32, #tpu.memory_space<vmem>>, vector<1x3x16xf32>
    %9 = vector.shape_cast %8 : vector<1x3x16xf32> to vector<3x16xf32>
    %10 = vector.shape_cast %7 : vector<3x16xf32> to vector<1x3x16xf32>
    tpu.vector_store %arg5[%c0_6, %c0_7, %c0_8], %10 {strides = array<i32>} : memref<1x3x16xf32, #tpu.memory_space<vmem>>, vector<1x3x16xf32>,
    return
  }
  func.func @transform_0(%arg0: i32, %arg1: i32) -> (i32, i32) {
    %c0_i32 = arith.constant 0 : i32
    %c0_i32_0 = arith.constant 0 : i32
    %c0_i32_1 = arith.constant 0 : i32
    return %c0_i32, %c0_i32_0 : i32, i32
  }
  func.func @transform_1(%arg0: i32, %arg1: i32) -> (i32, i32) {
    %c0_i32 = arith.constant 0 : i32
    %c0_i32_0 = arith.constant 0 : i32
    %c0_i32_1 = arith.constant 0 : i32
    return %c0_i32, %c0_i32_0 : i32, i32
  }
  func.func @transform_2(%arg0: i32, %arg1: i32) -> (i32, i32, i32) {
    %c0_i32 = arith.constant 0 : i32
    %c0_i32_0 = arith.constant 0 : i32
    return %arg0, %c0_i32, %arg1 : i32, i32, i32
  }
  func.func @transform_3(%arg0: i32, %arg1: i32) -> (i32, i32, i32) {
    %c0_i32 = arith.constant 0 : i32
    %c0_i32_0 = arith.constant 0 : i32
    return %arg0, %c0_i32, %arg1 : i32, i32, i32
  }
}

</mosaic_0001>

<llo_original>
// kernel: _lambda_.1
$region0: #{_lambda_.1}
  #allocation0 [shape = 'u32[]', space=smem, size = 0x4, offset = 0x4, fixed_abs, tag = 'smem constant byte address 0x4 - core index']
  #allocation1 [shape = 'u32[72,128]{1,0:T(1,128)}', space=vmem, size = 0x9000, scoped, tag = 'internal scratch']
  %s0 = inlined_call_operand.hbm [shape: f32[3,4], index: 0, kind: input, shape index: {}]
  %s1 = inlined_call_operand.hbm [shape: f32[3,1], index: 1, kind: input, shape index: {}]
  %s2 = inlined_call_operand.hbm [shape: f32[2,4,16], index: 2, kind: input, shape index: {}]
  %s3 = inlined_call_operand.vmem [shape: f32[2,3,16], index: 3, kind: output, shape index: {}]
  %s4 = sld [smem:[#allocation0]]
  $region57: #{_lambda_.1} parent=0
    _
  %s6 = ssub.s32 1, %s4
  %s7 = scalar_select 0, %s6, %s4
  $region1: #{_lambda_.1} parent=0
    #allocation2 [shape = 'u8[2048]{0}', space=vmem, size = 0x800, scoped, tag = 'input window, operand 0, single buffered']
    #allocation3 [shape = 's32[2]{0}', space=sflag, size = 0x8, scoped, tag = 'scoped memory for _lambda_.1']
    #allocation4 [shape = 'u8[2048]{0}', space=vmem, size = 0x800, scoped, tag = 'input window, operand 1, single buffered']
    #allocation5 [shape = 's32[1]{0}', space=sflag, size = 0x4, scoped, tag = 'scoped memory for _lambda_.1']
    #allocation6 [shape = 'u8[4096]{0}', space=vmem, size = 0x1000, scoped, tag = 'input window, operand 2']
    %8 = vsyncpa [#allocation3], 0
    %9 = vsyncpa [#allocation5], 0
    loop: start=0, step=1, limit=4
    $region2: #{_lambda_.1} parent=1 // loop_pre_header
      _
    $region3: #{_lambda_.1} parent=1 // loop_header
      %s11 = sphi 0, %s15
      %p12 = scmp.ge.s32.totalorder %s11, 4
      %s18 = sphi 0, %s30
      %s19 = sphi 0, %s26
      %s20 = sphi 0, %s18
      %s21 = sphi 0, %s19
      %s22 = sphi 0, %s20
      %s23 = sphi 0, %s21
      %s31 = sphi 0, %s31
      %s33 = sphi 0, %s31
      %s34 = sphi 0, %s33
      %s48 = sphi 0, %s34
      %s52 = sphi 0, %s52
      %s54 = sphi 0, %s52
      %s55 = sphi 0, %s54
      %s69 = sphi 0, %s55
      %s77 = sphi 0, %s79
      %s80 = sphi 0, %s77
      %s81 = sphi 0, %s80
      %s97 = sphi 0, %s81
      %s105 = sphi 0, %s107
      %s108 = sphi 0, %s105
      %s109 = sphi 0, %s108
      %s125 = sphi 0, %s109
    $region4: #{_lambda_.1} parent=1 // loop_header_branch
      %14 = sbr.rel (%p12) target = $region8
    $region5: #{_lambda_.1} parent=1 // loop_body
      %s16 = ssub.s32 %s11, 1
      %s17 = ssub.s32 %s11, 2
      %s24 = sadd.s32 1, %s19
      %p25 = scmp.ge.s32.totalorder %s24, 1
      %s26 = scalar_select %p25, 0, %s24
      %s27 = sadd.s32 1, %s18
      %s28 = scalar_select %p25, %s27, %s18
      %p29 = scmp.ge.s32.totalorder %s28, 2
      %s30 = scalar_select %p29, 0, %s28
      %s32 = sadd.s32 %s31, 1
      %p35 = scmp.eq.s32.totalorder %s11, 1
      %p36 = scmp.ne.s32.totalorder %s31, %s33
      %p37 = scmp.eq.s32.totalorder %s11, 0
      %p38 = por %p36, %p37
      %p39 = scmp.ne.s32.totalorder %s31, %s33
      %p40 = scmp.eq.s32.totalorder %s16, 1
      %p41 = por %p39, %p40
      %p42 = scmp.ne.s32.totalorder %s33, %s34
      %p43 = scmp.eq.s32.totalorder %s16, 0
      %p44 = por %p42, %p43
      %p45 = scmp.ne.s32.totalorder %s33, %s34
      %p46 = scmp.eq.s32.totalorder %s17, 1
      %p47 = por %p45, %p46
      %p49 = scmp.ne.s32.totalorder %s34, %s48
      %p50 = scmp.eq.s32.totalorder %s17, 0
      %p51 = por %p49, %p50
      %s53 = sadd.s32 %s52, 1
      %p56 = scmp.eq.s32.totalorder %s11, 1
      %p57 = scmp.ne.s32.totalorder %s52, %s54
      %p58 = scmp.eq.s32.totalorder %s11, 0
      %p59 = por %p57, %p58
      %p60 = scmp.ne.s32.totalorder %s52, %s54
      %p61 = scmp.eq.s32.totalorder %s16, 1
      %p62 = por %p60, %p61
      %p63 = scmp.ne.s32.totalorder %s54, %s55
      %p64 = scmp.eq.s32.totalorder %s16, 0
      %p65 = por %p63, %p64
      %p66 = scmp.ne.s32.totalorder %s54, %s55
      %p67 = scmp.eq.s32.totalorder %s17, 1
      %p68 = por %p66, %p67
      %p70 = scmp.ne.s32.totalorder %s55, %s69
      %p71 = scmp.eq.s32.totalorder %s17, 0
      %p72 = por %p70, %p71
      %s73 = ssub.s32 %s18, %s30
      %s74 = ssub.s32 %s19, %s26
      %s75 = sor.u32 %s73, %s74
      %p76 = scmp.eq.s32.totalorder %s75, 0
      %s78 = sadd.s32 %s77, 1
      %s79 = scalar_select %p76, %s77, %s78
      %p82 = pneg %p76
      %p83 = scmp.eq.s32.totalorder %s11, 1
      %p84 = por %p82, %p83
      %p85 = scmp.ne.s32.totalorder %s77, %s80
      %p86 = scmp.eq.s32.totalorder %s11, 0
      %p87 = por %p85, %p86
      %p88 = scmp.ne.s32.totalorder %s77, %s80
      %p89 = scmp.eq.s32.totalorder %s16, 1
      %p90 = por %p88, %p89
      %p91 = scmp.ne.s32.totalorder %s80, %s81
      %p92 = scmp.eq.s32.totalorder %s16, 0
      %p93 = por %p91, %p92
      %p94 = scmp.ne.s32.totalorder %s80, %s81
      %p95 = scmp.eq.s32.totalorder %s17, 1
      %p96 = por %p94, %p95
      %p98 = scmp.ne.s32.totalorder %s81, %s97
      %p99 = scmp.eq.s32.totalorder %s17, 0
      %p100 = por %p98, %p99
      %s101 = ssub.s32 %s18, %s30
      %s102 = ssub.s32 %s19, %s26
      %s103 = sor.u32 %s101, %s102
      %p104 = scmp.eq.s32.totalorder %s103, 0
      %s106 = sadd.s32 %s105, 1
      %s107 = scalar_select %p104, %s105, %s106
      %p110 = pneg %p104
      %p111 = scmp.eq.s32.totalorder %s11, 1
      %p112 = por %p110, %p111
      %p113 = scmp.ne.s32.totalorder %s105, %s108
      %p114 = scmp.eq.s32.totalorder %s11, 0
      %p115 = por %p113, %p114
      %p116 = scmp.ne.s32.totalorder %s105, %s108
      %p117 = scmp.eq.s32.totalorder %s16, 1
      %p118 = por %p116, %p117
      %p119 = scmp.ne.s32.totalorder %s108, %s109
      %p120 = scmp.eq.s32.totalorder %s16, 0
      %p121 = por %p119, %p120
      %p122 = scmp.ne.s32.totalorder %s108, %s109
      %p123 = scmp.eq.s32.totalorder %s17, 1
      %p124 = por %p122, %p123
      %p126 = scmp.ne.s32.totalorder %s109, %s125
      %p127 = scmp.eq.s32.totalorder %s17, 0
      %p128 = por %p126, %p127
      %p129 = scmp.le.s32.totalorder 1, %s11
      %p130 = scmp.lt.s32.totalorder %s11, 3
      %p131 = pnand %p129, %p130
      %p132 = pneg %p131
      // Predicated region
      $region9: #{_lambda_.1} parent=5 // pred_check
        _
      $region10: #{_lambda_.1} parent=5 // pred_check_branch
        %134 = sbr.rel (%p131) target = $region12
      $region11: #{_lambda_.1} parent=5 // pred_region
        %s135 = ssub.s32 %s11, 1
        // Predicated region
        $region13: #{_lambda_.1} parent=11 // pred_check
          %p136 = pneg %p44
        $region14: #{_lambda_.1} parent=11 // pred_check_branch
          %138 = sbr.rel (%p136) target = $region16
        $region15: #{_lambda_.1} parent=11 // pred_region
          %140 = vsyncadd [#allocation3], 0
          %s142 = sshll.u32 %s0, 4
          %s143 = int_to_ptr.hbm [resolvable:$true] %s142
          %s144 = sshll.u32 [#allocation2], 4
          %s145 = int_to_ptr.vmem [resolvable:$true] %s144
          %147 = dma.hbm_to_vmem [thread:$0]  %s143, 64, %s145, [#allocation3]
        $region16: #{_lambda_.1} parent=11 // pred_fallthru
          _
        // Predicated region
        $region17: #{_lambda_.1} parent=11 // pred_check
          %p148 = pneg %p65
        $region18: #{_lambda_.1} parent=11 // pred_check_branch
          %150 = sbr.rel (%p148) target = $region20
        $region19: #{_lambda_.1} parent=11 // pred_region
          %152 = vsyncadd [#allocation5], 0
          %s154 = sshll.u32 %s1, 4
          %s155 = int_to_ptr.hbm [resolvable:$true] %s154
          %s156 = sshll.u32 [#allocation4], 4
          %s157 = int_to_ptr.vmem [resolvable:$true] %s156
          %159 = dma.hbm_to_vmem [thread:$0]  %s155, 64, %s157, [#allocation5]
        $region20: #{_lambda_.1} parent=11 // pred_fallthru
          _
      $region12: #{_lambda_.1} parent=5 // pred_fallthru
        _
      %p160 = scmp.lt.s32.totalorder %s11, 2
      // Predicated region
      $region21: #{_lambda_.1} parent=5 // pred_check
        %p161 = pneg %p160
      $region22: #{_lambda_.1} parent=5 // pred_check_branch
        %163 = sbr.rel (%p161) target = $region24
      $region23: #{_lambda_.1} parent=5 // pred_region
        // Predicated region
        $region25: #{_lambda_.1} parent=23 // pred_check
          %p164 = pneg %p87
        $region26: #{_lambda_.1} parent=23 // pred_check_branch
          %166 = sbr.rel (%p164) target = $region28
        $region27: #{_lambda_.1} parent=23 // pred_region
          %s167 = sand.u32 %s11, 1
          %s168 = scalar_lea.sflag [#allocation3], %s167
          %s169 = sand.u32 %s77, 1
          %s170 = smul.addr %s169, 4
          %s171 = scalar_lea.vmem [#allocation6], %s170
          %173 = vsyncadd %s168, 0
          %s174 = sadd.s32 %s19, %s18
          %s175 = smul.addr %s174, 4
          %s176 = scalar_lea.hbm %s2, %s175
          %s178 = sshll.u32 %s176, 4
          %s179 = int_to_ptr.hbm [resolvable:$true] %s178
          %s180 = sshll.u32 %s171, 4
          %s181 = int_to_ptr.vmem [resolvable:$true] %s180
          %183 = dma.hbm_to_vmem [thread:$0]  %s179, 64, %s181, %s168
        $region28: #{_lambda_.1} parent=23 // pred_fallthru
          _
      $region24: #{_lambda_.1} parent=5 // pred_fallthru
        _
      %p184 = scmp.le.s32.totalorder 1, %s11
      %p185 = scmp.lt.s32.totalorder %s11, 3
      %p186 = pnand %p184, %p185
      %p187 = pneg %p186
      // Predicated region
      $region29: #{_lambda_.1} parent=5 // pred_check
        _
      $region30: #{_lambda_.1} parent=5 // pred_check_branch
        %189 = sbr.rel (%p186) target = $region32
      $region31: #{_lambda_.1} parent=5 // pred_region
        %s190 = ssub.s32 %s11, 1
        // Predicated region
        $region33: #{_lambda_.1} parent=31 // pred_check
          %p191 = pneg %p44
        $region34: #{_lambda_.1} parent=31 // pred_check_branch
          %193 = sbr.rel (%p191) target = $region36
        $region35: #{_lambda_.1} parent=31 // pred_region
          %195 = dma.done [#allocation3], 64
        $region36: #{_lambda_.1} parent=31 // pred_fallthru
          _
        // Predicated region
        $region37: #{_lambda_.1} parent=31 // pred_check
          %p196 = pneg %p65
        $region38: #{_lambda_.1} parent=31 // pred_check_branch
          %198 = sbr.rel (%p196) target = $region40
        $region39: #{_lambda_.1} parent=31 // pred_region
          %200 = dma.done [#allocation5], 64
        $region40: #{_lambda_.1} parent=31 // pred_fallthru
          _
        %s201 = sand.u32 %s16, 1
        %s202 = scalar_lea.sflag [#allocation3], %s201
        %s203 = sand.u32 %s80, 1
        %s204 = smul.addr %s203, 4
        %s205 = scalar_lea.vmem [#allocation6], %s204
        // Predicated region
        $region41: #{_lambda_.1} parent=31 // pred_check
          %p206 = pneg %p93
        $region42: #{_lambda_.1} parent=31 // pred_check_branch
          %208 = sbr.rel (%p206) target = $region44
        $region43: #{_lambda_.1} parent=31 // pred_region
          %210 = dma.done %s202, 64
        $region44: #{_lambda_.1} parent=31 // pred_fallthru
          _
        %p211 = pneg %p44
        %p212 = pneg %p41
        %p213 = pneg %p65
        %p214 = pneg %p62
        %s215 = sand.u32 %s16, 1
        %s216 = scalar_lea.sflag [#allocation3], %s215
        %s217 = sand.u32 %s80, 1
        %s218 = smul.addr %s217, 4
        %s219 = scalar_lea.vmem [#allocation6], %s218
        %p220 = pneg %p93
        %p221 = pneg %p90
        %p222 = pneg %p121
        %p223 = pneg %p118
        %p224 = scmp.lt.s32.totalorder %s20, 1
        %s225 = scalar_select %p224, %s20, 1
        %p226 = scmp.lt.s32.totalorder %s21, 0
        %s227 = scalar_select %p226, %s21, 0
        %s228 = sadd.s32 %s227, %s225
        %s229 = smul.addr %s228, 4
        %s230 = scalar_lea.vmem %s3, %s229
        %p231 = scmp.lt.s32.totalorder %s20, 1
        %s232 = scalar_select %p231, %s20, 1
        %p233 = scmp.lt.s32.totalorder %s21, 0
        %s234 = scalar_select %p233, %s21, 0
        %s235 = sadd.s32 %s234, %s232
        %s236 = smul.addr %s235, 4
        %s237 = scalar_lea.vmem %s3, %s236
        %v238 = vld [vmem:[#allocation2] sm:$0x7]
        %v239 = vld [vmem:[%s205] sm:$0xf]
        %v240 = vld [vmem:[#allocation4] sm:$0x7]
        %242 = vset.pattern.permute.xlu0 0
        %243 = vperm.xlu0 %242, %v240
        %v244 = vpop.permute.xlu0 %243
        %vm246 = vcmask 31744
        %v248 = vsel %vm246, %v238, 0
        %vm250 = vcmask 1043456
        %v252 = vsel %vm250, %v239, 0
        %254 = vmatpush.msra.mxu0 0.0
        %255 = vmatpush.msra.mxu0 0.0
        %256 = vmatpush.msra.mxu0 0.0
        %257 = vmatpush.msra.mxu0 0.0
        %258 = vmatpush.msra.mxu0 0.0
        %259 = vmatpush.msra.mxu0 0.0
        %260 = vmatpush.msra.mxu0 0.0
        %261 = vmatpush.msra.mxu0 0.0
        %262 = vmatpush.msra.mxu0 0.0
        %263 = vmatpush.msra.mxu0 0.0
        %264 = vmatpush.msra.mxu0 0.0
        %265 = vmatpush.msra.mxu0 0.0
        %266 = vmatpush.msra.mxu0 0.0
        %267 = vmatpush.msra.mxu0 0.0
        %268 = vmatpush.msra.mxu0 0.0
        %269 = vmatpush.msra.mxu0 %v252
        %270 = vmatmul.f32.gmra.mxu0 %v248
        %v271 = vpop.f32.mrf.mxu0
        %v272 = vadd.f32 %v244, %v271
        %273 = vdwg.mxu0
        %v274 = vtanh.pop %v272
        %vm275 = vcmask 124928
        %276 = vst.msk [vmem:[%s237] sm:$0x7] %vm275, %v274
        %p277 = scmp.lt.s32.totalorder %s20, 1
        %s278 = scalar_select %p277, %s20, 1
        %p279 = scmp.lt.s32.totalorder %s21, 0
        %s280 = scalar_select %p279, %s21, 0
        %s281 = sadd.s32 %s280, %s278
        %s282 = smul.addr %s281, 4
        %s283 = scalar_lea.vmem %s3, %s282
        // Predicated region
        $region45: #{_lambda_.1} parent=31 // pred_check
          %p284 = pneg %p118
        $region46: #{_lambda_.1} parent=31 // pred_check_branch
          %286 = sbr.rel (%p284) target = $region48
        $region47: #{_lambda_.1} parent=31 // pred_region
          _
        $region48: #{_lambda_.1} parent=31 // pred_fallthru
          _
      $region32: #{_lambda_.1} parent=5 // pred_fallthru
        _
      %p287 = scmp.le.s32.totalorder 2, %s11
      // Predicated region
      $region49: #{_lambda_.1} parent=5 // pred_check
        %p288 = pneg %p287
      $region50: #{_lambda_.1} parent=5 // pred_check_branch
        %290 = sbr.rel (%p288) target = $region52
      $region51: #{_lambda_.1} parent=5 // pred_region
        %s291 = ssub.s32 %s11, 2
        // Predicated region
        $region53: #{_lambda_.1} parent=51 // pred_check
          %p292 = pneg %p124
        $region54: #{_lambda_.1} parent=51 // pred_check_branch
          %294 = sbr.rel (%p292) target = $region56
        $region55: #{_lambda_.1} parent=51 // pred_region
          %p295 = scmp.lt.s32.totalorder %s22, 1
          %s296 = scalar_select %p295, %s22, 1
          %p297 = scmp.lt.s32.totalorder %s23, 0
          %s298 = scalar_select %p297, %s23, 0
          %s299 = sadd.s32 %s298, %s296
          %s300 = smul.addr %s299, 4
          %s301 = scalar_lea.vmem %s3, %s300
        $region56: #{_lambda_.1} parent=51 // pred_fallthru
          _
      $region52: #{_lambda_.1} parent=5 // pred_fallthru
        _
    $region6: #{_lambda_.1} parent=1 // loop_footer
      %s15 = sadd.s32 1, %s11
    $region7: #{_lambda_.1} parent=1 // loop_footer_branch
      %10 = sbr.rel target = $region3
    $region8: #{_lambda_.1} parent=1 // loop_exit
      _
    %302 = vsyncpa [#allocation3], 1
    %s303 = scalar_lea.sflag [#allocation3], 1
    %304 = vsyncpa %s303, 1
    %305 = vsyncpa [#allocation5], 1

</llo_original>
